<compile_context>
chip_gen: v7x
topology: tpu7x:2x2x1
jax: 0.10.0
libtpu: 0.0.40
codegen_flags: <defaults>
</compile_context>

<pallas_src>
import functools

import jax
import jax.numpy as jnp
from jax.experimental import pallas as pl
from jax.experimental.pallas import tpu as pltpu

HIDDEN = 128
LOG_STD_MIN = -2.0
LOG_STD_MAX = 2.0


def _round_up(x, m):
    return ((x + m - 1) // m) * m


# --------------------------------------------------------------------------- #
# Kernel
# --------------------------------------------------------------------------- #
def _policy_kernel(state_ref, cond_ref, w1_ref, w2_ref, wc_ref, wh_ref, bias_ref,
                   mean_ref, log_std_ref, *, num_actions):
    A = num_actions

    # Packed biases: [b1 | (b2 + bc) | bm | bs]  (f32)
    b1 = bias_ref[:, 0:HIDDEN]
    b2c = bias_ref[:, HIDDEN:2 * HIDDEN]
    bh = bias_ref[:, 2 * HIDDEN:2 * HIDDEN + 2 * A]

    # Streamed activations -> bf16 for the MXU; accumulation stays f32.
    s = state_ref[...].astype(jnp.bfloat16)
    c = cond_ref[...].astype(jnp.bfloat16)

    # linear1 + relu
    x = jnp.dot(s, w1_ref[...], preferred_element_type=jnp.float32) + b1
    x = jnp.maximum(x, 0.0)

    # linear2 + condition_layer (split dots, no padded concat) + relu
    x = (jnp.dot(x.astype(jnp.bfloat16), w2_ref[...],
                 preferred_element_type=jnp.float32)
         + jnp.dot(c, wc_ref[...], preferred_element_type=jnp.float32)
         + b2c)
    x = jnp.maximum(x, 0.0)

    # fused mean/log_std head: cols [0, A) = mean, [A, 2A) = log_std
    head = jnp.dot(x.astype(jnp.bfloat16), wh_ref[...],
                   preferred_element_type=jnp.float32) + bh
    mean_ref[...] = head[:, :A].astype(mean_ref.dtype)
    log_std_ref[...] = jnp.clip(head[:, A:2 * A],
                                LOG_STD_MIN, LOG_STD_MAX).astype(log_std_ref.dtype)


# --------------------------------------------------------------------------- #
# Parameter fusion (done once, outside the per-step forward)
# --------------------------------------------------------------------------- #
def prepare_fused_params(params, condition_size, *, compute_dtype=jnp.bfloat16):
    """Pack the 5 Linear layers into 4 weight arrays (bf16) + 1 bias pack (f32)."""
    num_actions = params["wm"].shape[1]

    # Fuse the two heads along the output axis (no lane padding: 2*A wide).
    wh = jnp.concatenate([params["wm"], params["ws"]], axis=1)     # [HIDDEN, 2A]
    bh = jnp.concatenate([params["bm"], params["bs"]], axis=1)     # [1, 2A]

    b2c = params["b2"] + params["bc"]                              # [1, HIDDEN]
    bias_pack = jnp.concatenate([params["b1"], b2c, bh],
                                axis=1).astype(jnp.float32)        # [1, 2H + 2A]

    return dict(
        w1=params["w1"].astype(compute_dtype),                    # [num_inputs, H]
        w2=params["w2"].astype(compute_dtype),                    # [H, H]
        wc=params["wc"].astype(compute_dtype),                    # [C, H]
        wh=wh.astype(compute_dtype),                               # [H, 2A]
        bias_pack=bias_pack,
        num_actions=num_actions,
        condition_size=condition_size,
    )


# --------------------------------------------------------------------------- #
# Forward wrapper
# --------------------------------------------------------------------------- #
def policy_network_forward(state, condition, fused, *, batch_tile=1024):
    """PolicyNetwork.forward(state, condition) -> (mean, log_std)."""
    B, num_inputs = state.shape
    A = fused["num_actions"]
    C = fused["condition_size"]
    assert condition.shape == (B, C)

    # Batch tile: single tile for small batches, up to `batch_tile` rows otherwise.
    b_tile = min(_round_up(B, 8), batch_tile)
    # v7x has 2 TensorCores; give the "parallel" axis >= 2 tiles once B is big
    # enough that the extra ~0.35 us grid-step overhead is irrelevant.
    if B >= 512 and pl.cdiv(B, b_tile) == 1:
        b_tile = _round_up(pl.cdiv(B, 2), 8)
    n_tiles = pl.cdiv(B, b_tile)

    w1, w2, wc, wh, bias_pack = (fused["w1"], fused["w2"], fused["wc"],
                                 fused["wh"], fused["bias_pack"])

    flops = 2 * B * (num_inputs * HIDDEN + HIDDEN * HIDDEN
                     + C * HIDDEN + HIDDEN * 2 * A)
    bytes_accessed = (state.size * state.dtype.itemsize
                      + condition.size * condition.dtype.itemsize
                      + sum(w.size * w.dtype.itemsize
                            for w in (w1, w2, wc, wh, bias_pack))
                      + 2 * B * A * 4)

    mean, log_std = pl.pallas_call(
        functools.partial(_policy_kernel, num_actions=A),
        out_shape=(jax.ShapeDtypeStruct((B, A), jnp.float32),
                   jax.ShapeDtypeStruct((B, A), jnp.float32)),
        grid=(n_tiles,),
        in_specs=[
            # batch-tiled activations (last dims = full array dims -> legal)
            pl.BlockSpec((b_tile, num_inputs), lambda i: (i, 0)),
            pl.BlockSpec((b_tile, C), lambda i: (i, 0)),
            # weights / biases: constant block index -> DMA'd once, VMEM-resident
            pl.BlockSpec((num_inputs, HIDDEN), lambda i: (0, 0)),
            pl.BlockSpec((HIDDEN, HIDDEN), lambda i: (0, 0)),
            pl.BlockSpec((C, HIDDEN), lambda i: (0, 0)),
            pl.BlockSpec((HIDDEN, 2 * A), lambda i: (0, 0)),
            pl.BlockSpec((1, 2 * HIDDEN + 2 * A), lambda i: (0, 0)),
        ],
        out_specs=(pl.BlockSpec((b_tile, A), lambda i: (i, 0)),
                   pl.BlockSpec((b_tile, A), lambda i: (i, 0))),
        compiler_params=pltpu.CompilerParams(
            dimension_semantics=("parallel",)),
        cost_estimate=pl.CostEstimate(flops=flops, transcendentals=0,
                                      bytes_accessed=bytes_accessed),
    )(state, condition, w1, w2, wc, wh, bias_pack)

    return mean, log_std


# --------------------------------------------------------------------------- #
# Init + pure-JAX reference (f32)
# --------------------------------------------------------------------------- #
def init_params(key, num_inputs, num_actions, condition_size):
    """PyTorch-default-like Linear init; weights stored as [in, out]."""
    def linear(k, fan_in, fan_out):
        kw, kb = jax.random.split(k)
        bound = 1.0 / jnp.sqrt(jnp.float32(fan_in))
        w = jax.random.uniform(kw, (fan_in, fan_out), jnp.float32, -bound, bound)
        b = jax.random.uniform(kb, (1, fan_out), jnp.float32, -bound, bound)
        return w, b

    k1, k2, kc, km, ks = jax.random.split(key, 5)
    w1, b1 = linear(k1, num_inputs, HIDDEN)
    w2, b2 = linear(k2, HIDDEN, HIDDEN)
    wc, bc = linear(kc, condition_size, HIDDEN)
    wm, bm = linear(km, HIDDEN, num_actions)
    ws, bs = linear(ks, HIDDEN, num_actions)
    return dict(w1=w1, b1=b1, w2=w2, b2=b2, wc=wc, bc=bc,
                wm=wm, bm=bm, ws=ws, bs=bs)


def _reference_forward(state, condition, p):
    x = jax.nn.relu(state @ p["w1"] + p["b1"])
    x = jax.nn.relu(x @ p["w2"] + p["b2"] + condition @ p["wc"] + p["bc"])
    mean = x @ p["wm"] + p["bm"]
    log_std = jnp.clip(x @ p["ws"] + p["bs"], LOG_STD_MIN, LOG_STD_MAX)
    return mean, log_std


# TODO(synk): get_action's Normal(0,1) sampling / tanh squash and the
# get_condition / get_zero_condition helpers are host-side conveniences, not
# part of forward(); left out of the kernel.

if __name__ == "__main__":
    num_inputs = 32
    num_actions = 8
    condition_size = 8

    key = jax.random.PRNGKey(0)
    k_params, k_s1, k_s2, k_s3 = jax.random.split(key, 4)

    params = init_params(k_params, num_inputs, num_actions, condition_size)
    fused = prepare_fused_params(params, condition_size)

    def check(batch, k_state, cond_idx, atol=5e-2):
        state = jax.random.normal(k_state, (batch, num_inputs), jnp.float32)
        condition = jnp.zeros((batch, condition_size),
                              jnp.float32).at[:, cond_idx].set(1.0)

        mean, log_std = policy_network_forward(state, condition, fused)
        jax.block_until_ready((mean, log_std))

        ref_mean, ref_log_std = _reference_forward(state, condition, params)
        assert mean.shape == (batch, num_actions)
        assert log_std.shape == (batch, num_actions)
        # bf16 matmul inputs -> looser tolerance than the f32 reference.
        assert jnp.allclose(mean, ref_mean, atol=atol, rtol=atol)
        assert jnp.allclose(log_std, ref_log_std, atol=atol, rtol=atol)

    check(8, k_s1, 1)      # small batch: single exact tile
    check(300, k_s2, 2)    # ragged single tile (304-row block over 300 rows)
    check(600, k_s3, 3)    # split into 2 parallel tiles (v7x megacore) + ragged last

    print("KERNEL_OK")
</pallas_src>

<mosaic_0001>
module attributes {stable_mosaic.version = 11 : i64} {
  func.func @_policy_kernel(%arg0: i32, %arg1: memref<8x32xf32, #tpu.memory_space<vmem>>, %arg2: memref<8x8xf32, #tpu.memory_space<vmem>>, %arg3: memref<32x128xbf16, #tpu.memory_space<vmem>>, %arg4: memref<128x128xbf16, #tpu.memory_space<vmem>>, %arg5: memref<8x128xbf16, #tpu.memory_space<vmem>>, %arg6: memref<128x16xbf16, #tpu.memory_space<vmem>>, %arg7: memref<1x272xf32, #tpu.memory_space<vmem>>, %arg8: memref<8x8xf32, #tpu.memory_space<vmem>>, %arg9: memref<8x8xf32, #tpu.memory_space<vmem>>) attributes {dimension_semantics = [#tpu.dimension_semantics<parallel>], iteration_bounds = array<i64: 1>, scalar_prefetch = 0 : i64, scratch_operands = 0 : i64, tpu.core_type = #tpu.core_type<tc>, window_params = [{transform_indices = @transform_0, window_bounds = array<i64: 8, 32>}, {transform_indices = @transform_1, window_bounds = array<i64: 8, 8>}, {pipeline_mode = #tpu.pipeline_mode<synchronous>, transform_indices = @transform_2, window_bounds = array<i64: 32, 128>}, {pipeline_mode = #tpu.pipeline_mode<synchronous>, transform_indices = @transform_3, window_bounds = array<i64: 128, 128>}, {pipeline_mode = #tpu.pipeline_mode<synchronous>, transform_indices = @transform_4, window_bounds = array<i64: 8, 128>}, {pipeline_mode = #tpu.pipeline_mode<synchronous>, transform_indices = @transform_5, window_bounds = array<i64: 128, 16>}, {pipeline_mode = #tpu.pipeline_mode<synchronous>, transform_indices = @transform_6, window_bounds = array<i64: 1, 272>}, {transform_indices = @transform_7, window_bounds = array<i64: 8, 8>}, {transform_indices = @transform_8, window_bounds = array<i64: 8, 8>}]} {
    %c0 = arith.constant 0 : index
    %c0_0 = arith.constant 0 : index
    %0 = vector.load %arg7[%c0, %c0_0] : memref<1x272xf32, #tpu.memory_space<vmem>>, vector<1x128xf32>
    %c0_1 = arith.constant 0 : index
    %c128 = arith.constant 128 : index
    %1 = vector.load %arg7[%c0_1, %c128] : memref<1x272xf32, #tpu.memory_space<vmem>>, vector<1x128xf32>
    %c0_2 = arith.constant 0 : index
    %c256 = arith.constant 256 : index
    %2 = vector.load %arg7[%c0_2, %c256] : memref<1x272xf32, #tpu.memory_space<vmem>>, vector<1x16xf32>
    %c0_3 = arith.constant 0 : index
    %c0_4 = arith.constant 0 : index
    %3 = vector.load %arg1[%c0_3, %c0_4] : memref<8x32xf32, #tpu.memory_space<vmem>>, vector<8x32xf32>
    %4 = arith.truncf %3 : vector<8x32xf32> to vector<8x32xbf16>
    %c0_5 = arith.constant 0 : index
    %c0_6 = arith.constant 0 : index
    %5 = vector.load %arg2[%c0_5, %c0_6] : memref<8x8xf32, #tpu.memory_space<vmem>>, vector<8x8xf32>
    %6 = arith.truncf %5 : vector<8x8xf32> to vector<8x8xbf16>
    %c0_7 = arith.constant 0 : index
    %c0_8 = arith.constant 0 : index
    %7 = vector.load %arg3[%c0_7, %c0_8] : memref<32x128xbf16, #tpu.memory_space<vmem>>, vector<32x128xbf16>
    %cst = arith.constant dense<0.000000e+00> : vector<8x128xf32>
    %8 = tpu.matmul %4, %7, %cst {dimension_numbers = #tpu.dot_dimension_numbers<[1], [0], [0], [1], [0, 0, 1, 1], [], []>} : vector<8x32xbf16>, vector<32x128xbf16>, vector<8x128xf32> -> vector<8x128xf32>
    %9 = vector.broadcast %0 : vector<1x128xf32> to vector<8x128xf32>
    %10 = arith.addf %8, %9 : vector<8x128xf32>
    %cst_9 = arith.constant 0.000000e+00 : f32
    %11 = vector.broadcast %cst_9 : f32 to vector<8x128xf32>
    %12 = arith.maximumf %10, %11 : vector<8x128xf32>
    %13 = arith.truncf %12 : vector<8x128xf32> to vector<8x128xbf16>
    %c0_10 = arith.constant 0 : index
    %c0_11 = arith.constant 0 : index
    %14 = vector.load %arg4[%c0_10, %c0_11] : memref<128x128xbf16, #tpu.memory_space<vmem>>, vector<128x128xbf16>
    %cst_12 = arith.constant dense<0.000000e+00> : vector<8x128xf32>
    %15 = tpu.matmul %13, %14, %cst_12 {dimension_numbers = #tpu.dot_dimension_numbers<[1], [0], [0], [1], [0, 0, 1, 1], [], []>} : vector<8x128xbf16>, vector<128x128xbf16>, vector<8x128xf32> -> vector<8x128xf32>
    %c0_13 = arith.constant 0 : index
    %c0_14 = arith.constant 0 : index
    %16 = vector.load %arg5[%c0_13, %c0_14] : memref<8x128xbf16, #tpu.memory_space<vmem>>, vector<8x128xbf16>
    %cst_15 = arith.constant dense<0.000000e+00> : vector<8x128xf32>
    %17 = tpu.matmul %6, %16, %cst_15 {dimension_numbers = #tpu.dot_dimension_numbers<[1], [0], [0], [1], [0, 0, 1, 1], [], []>} : vector<8x8xbf16>, vector<8x128xbf16>, vector<8x128xf32> -> vector<8x128xf32>
    %18 = arith.addf %15, %17 : vector<8x128xf32>
    %19 = vector.broadcast %1 : vector<1x128xf32> to vector<8x128xf32>
    %20 = arith.addf %18, %19 : vector<8x128xf32>
    %cst_16 = arith.constant 0.000000e+00 : f32
    %21 = vector.broadcast %cst_16 : f32 to vector<8x128xf32>
    %22 = arith.maximumf %20, %21 : vector<8x128xf32>
    %23 = arith.truncf %22 : vector<8x128xf32> to vector<8x128xbf16>
    %c0_17 = arith.constant 0 : index
    %c0_18 = arith.constant 0 : index
    %24 = vector.load %arg6[%c0_17, %c0_18] : memref<128x16xbf16, #tpu.memory_space<vmem>>, vector<128x16xbf16>
    %cst_19 = arith.constant dense<0.000000e+00> : vector<8x16xf32>
    %25 = tpu.matmul %23, %24, %cst_19 {dimension_numbers = #tpu.dot_dimension_numbers<[1], [0], [0], [1], [0, 0, 1, 1], [], []>} : vector<8x128xbf16>, vector<128x16xbf16>, vector<8x16xf32> -> vector<8x16xf32>
    %26 = vector.broadcast %2 : vector<1x16xf32> to vector<8x16xf32>
    %27 = arith.addf %25, %26 : vector<8x16xf32>
    %28 = vector.extract_strided_slice %27 {offsets = [0, 0], sizes = [8, 8], strides = [1, 1]} : vector<8x16xf32> to vector<8x8xf32>
    %c0_20 = arith.constant 0 : index
    %c0_21 = arith.constant 0 : index
    %29 = vector.load %arg8[%c0_20, %c0_21] : memref<8x8xf32, #tpu.memory_space<vmem>>, vector<8x8xf32>
    tpu.vector_store %arg8[%c0_20, %c0_21], %28 {strides = array<i32>} : memref<8x8xf32, #tpu.memory_space<vmem>>, vector<8x8xf32>,
    %30 = vector.extract_strided_slice %27 {offsets = [0, 8], sizes = [8, 8], strides = [1, 1]} : vector<8x16xf32> to vector<8x8xf32>
    %cst_22 = arith.constant -2.000000e+00 : f32
    %cst_23 = arith.constant 2.000000e+00 : f32
    %31 = vector.broadcast %cst_22 : f32 to vector<8x8xf32>
    %32 = arith.maximumf %31, %30 : vector<8x8xf32>
    %33 = vector.broadcast %cst_23 : f32 to vector<8x8xf32>
    %34 = arith.minimumf %33, %32 : vector<8x8xf32>
    %c0_24 = arith.constant 0 : index
    %c0_25 = arith.constant 0 : index
    %35 = vector.load %arg9[%c0_24, %c0_25] : memref<8x8xf32, #tpu.memory_space<vmem>>, vector<8x8xf32>
    tpu.vector_store %arg9[%c0_24, %c0_25], %34 {strides = array<i32>} : memref<8x8xf32, #tpu.memory_space<vmem>>, vector<8x8xf32>,
    return
  }
  func.func @transform_0(%arg0: i32) -> (i32, i32) {
    %c0_i32 = arith.constant 0 : i32
    %c0_i32_0 = arith.constant 0 : i32
    return %arg0, %c0_i32 : i32, i32
  }
  func.func @transform_1(%arg0: i32) -> (i32, i32) {
    %c0_i32 = arith.constant 0 : i32
    %c0_i32_0 = arith.constant 0 : i32
    return %arg0, %c0_i32 : i32, i32
  }
  func.func @transform_2(%arg0: i32) -> (i32, i32) {
    %c0_i32 = arith.constant 0 : i32
    %c0_i32_0 = arith.constant 0 : i32
    %c0_i32_1 = arith.constant 0 : i32
    return %c0_i32, %c0_i32_0 : i32, i32
  }
  func.func @transform_3(%arg0: i32) -> (i32, i32) {
    %c0_i32 = arith.constant 0 : i32
    %c0_i32_0 = arith.constant 0 : i32
    %c0_i32_1 = arith.constant 0 : i32
    return %c0_i32, %c0_i32_0 : i32, i32
  }
  func.func @transform_4(%arg0: i32) -> (i32, i32) {
    %c0_i32 = arith.constant 0 : i32
    %c0_i32_0 = arith.constant 0 : i32
    %c0_i32_1 = arith.constant 0 : i32
    return %c0_i32, %c0_i32_0 : i32, i32
  }
  func.func @transform_5(%arg0: i32) -> (i32, i32) {
    %c0_i32 = arith.constant 0 : i32
    %c0_i32_0 = arith.constant 0 : i32
    %c0_i32_1 = arith.constant 0 : i32
    return %c0_i32, %c0_i32_0 : i32, i32
  }
  func.func @transform_6(%arg0: i32) -> (i32, i32) {
    %c0_i32 = arith.constant 0 : i32
    %c0_i32_0 = arith.constant 0 : i32
    %c0_i32_1 = arith.constant 0 : i32
    return %c0_i32, %c0_i32_0 : i32, i32
  }
  func.func @transform_7(%arg0: i32) -> (i32, i32) {
    %c0_i32 = arith.constant 0 : i32
    %c0_i32_0 = arith.constant 0 : i32
    return %arg0, %c0_i32 : i32, i32
  }
  func.func @transform_8(%arg0: i32) -> (i32, i32) {
    %c0_i32 = arith.constant 0 : i32
    %c0_i32_0 = arith.constant 0 : i32
    return %arg0, %c0_i32 : i32, i32
  }
}

</mosaic_0001>

<llo_original>
// kernel: tpu_custom_call.1
$region0: #{tpu_custom_call.1}
  #allocation0 [shape = 'u32[]', space=smem, size = 0x4, offset = 0x4, fixed_abs, tag = 'smem constant byte address 0x4 - core index']
  #allocation1 [shape = 'u32[144,128]{1,0:T(1,128)}', space=vmem, size = 0x12000, scoped, tag = 'internal scratch']
  %s0 = inlined_call_operand.hbm [shape: f32[8,32], index: 0, kind: input, shape index: {}]
  %s1 = inlined_call_operand.hbm [shape: f32[8,8], index: 1, kind: input, shape index: {}]
  %s2 = inlined_call_operand.vmem [shape: bf16[32,128], index: 2, kind: input, shape index: {}]
  %s3 = inlined_call_operand.vmem [shape: bf16[128,128], index: 3, kind: input, shape index: {}]
  %s4 = inlined_call_operand.hbm [shape: bf16[8,128], index: 4, kind: input, shape index: {}]
  %s5 = inlined_call_operand.vmem [shape: bf16[128,16], index: 5, kind: input, shape index: {}]
  %s6 = inlined_call_operand.vmem [shape: f32[1,272], index: 6, kind: input, shape index: {}]
  %s7 = inlined_call_operand.hbm [shape: f32[8,8], index: 7, kind: output, shape index: {0}]
  %s8 = inlined_call_operand.hbm [shape: f32[8,8], index: 8, kind: output, shape index: {1}]
  %9 = xla_tuple %s7, %s8
  %s10 = sld [smem:[#allocation0]]
  $region58: #{tpu_custom_call.1} parent=0
    _
  %s12 = ssub.s32 1, %s10
  %s13 = scalar_select 0, %s12, %s10
  $region1: #{tpu_custom_call.1} parent=0
    #allocation2 [shape = 'u8[4096]{0}', space=vmem, size = 0x1000, scoped, tag = 'input window, operand 0, single buffered']
    #allocation3 [shape = 's32[1]{0}', space=sflag, size = 0x4, scoped, tag = 'scoped memory for tpu_custom_call.1']
    #allocation4 [shape = 's32[1]{0}', space=sflag, size = 0x4, scoped, tag = 'scoped memory for tpu_custom_call.1']
    #allocation5 [shape = 'u8[4096]{0}', space=vmem, size = 0x1000, scoped, tag = 'input window, operand 1, single buffered']
    #allocation6 [shape = 's32[1]{0}', space=sflag, size = 0x4, scoped, tag = 'scoped memory for tpu_custom_call.1']
    #allocation7 [shape = 'u8[2048]{0}', space=vmem, size = 0x800, scoped, tag = 'input window, operand 4, single buffered']
    #allocation8 [shape = 'u8[4096]{0}', space=vmem, size = 0x1000, scoped, tag = 'output window, operand 0, single buffered']
    #allocation9 [shape = 'u8[4096]{0}', space=vmem, size = 0x1000, scoped, tag = 'output window, operand 1, single buffered']
    #allocation10 [shape = 's32[1]{0}', space=sflag, size = 0x4, scoped, tag = 'scoped memory for tpu_custom_call.1']
    %14 = vsyncpa [#allocation3], 0
    %15 = vsyncpa [#allocation6], 0
    %16 = vsyncpa [#allocation4], 0
    %17 = vsyncpa [#allocation10], 0
    // Predicated region
    $region2: #{tpu_custom_call.1} parent=1 // pred_check
      _
    $region3: #{tpu_custom_call.1} parent=1 // pred_check_branch
      %19 = sbr.rel (0) target = $region5
    $region4: #{tpu_custom_call.1} parent=1 // pred_region
      %s21 = ssub.s32 128, 128
      %22 = vsyncadd [#allocation3], %s21
      %s24 = sshll.u32 [#allocation2], 4
      %s25 = int_to_ptr.vmem [resolvable:$true] %s24
      %27 = dma.hbm_to_vmem [thread:$0]  %s0, 128, %s25, [#allocation3]
    $region5: #{tpu_custom_call.1} parent=1 // pred_fallthru
      _
    // Predicated region
    $region6: #{tpu_custom_call.1} parent=1 // pred_check
      _
    $region7: #{tpu_custom_call.1} parent=1 // pred_check_branch
      %29 = sbr.rel (0) target = $region9
    $region8: #{tpu_custom_call.1} parent=1 // pred_region
      %s31 = ssub.s32 128, 128
      %32 = vsyncadd [#allocation6], %s31
      %s34 = sshll.u32 [#allocation5], 4
      %s35 = int_to_ptr.vmem [resolvable:$true] %s34
      %37 = dma.hbm_to_vmem [thread:$0]  %s1, 128, %s35, [#allocation6]
    $region9: #{tpu_custom_call.1} parent=1 // pred_fallthru
      _
    // Predicated region
    $region10: #{tpu_custom_call.1} parent=1 // pred_check
      _
    $region11: #{tpu_custom_call.1} parent=1 // pred_check_branch
      %39 = sbr.rel (0) target = $region13
    $region12: #{tpu_custom_call.1} parent=1 // pred_region
      _
    $region13: #{tpu_custom_call.1} parent=1 // pred_fallthru
      _
    // Predicated region
    $region14: #{tpu_custom_call.1} parent=1 // pred_check
      _
    $region15: #{tpu_custom_call.1} parent=1 // pred_check_branch
      %41 = sbr.rel (0) target = $region17
    $region16: #{tpu_custom_call.1} parent=1 // pred_region
      _
    $region17: #{tpu_custom_call.1} parent=1 // pred_fallthru
      _
    // Predicated region
    $region18: #{tpu_custom_call.1} parent=1 // pred_check
      _
    $region19: #{tpu_custom_call.1} parent=1 // pred_check_branch
      %43 = sbr.rel (0) target = $region21
    $region20: #{tpu_custom_call.1} parent=1 // pred_region
      %s45 = ssub.s32 64, 64
      %46 = vsyncadd [#allocation6], %s45
      %s48 = sshll.u32 [#allocation7], 4
      %s49 = int_to_ptr.vmem [resolvable:$true] %s48
      %51 = dma.hbm_to_vmem [thread:$0]  %s4, 64, %s49, [#allocation6]
    $region21: #{tpu_custom_call.1} parent=1 // pred_fallthru
      _
    // Predicated region
    $region22: #{tpu_custom_call.1} parent=1 // pred_check
      _
    $region23: #{tpu_custom_call.1} parent=1 // pred_check_branch
      %53 = sbr.rel (0) target = $region25
    $region24: #{tpu_custom_call.1} parent=1 // pred_region
      _
    $region25: #{tpu_custom_call.1} parent=1 // pred_fallthru
      _
    // Predicated region
    $region26: #{tpu_custom_call.1} parent=1 // pred_check
      _
    $region27: #{tpu_custom_call.1} parent=1 // pred_check_branch
      %55 = sbr.rel (0) target = $region29
    $region28: #{tpu_custom_call.1} parent=1 // pred_region
      _
    $region29: #{tpu_custom_call.1} parent=1 // pred_fallthru
      _
    // Predicated region
    $region30: #{tpu_custom_call.1} parent=1 // pred_check
      _
    $region31: #{tpu_custom_call.1} parent=1 // pred_check_branch
      %57 = sbr.rel (0) target = $region33
    $region32: #{tpu_custom_call.1} parent=1 // pred_region
      %58 = dma.done [#allocation3], 128
    $region33: #{tpu_custom_call.1} parent=1 // pred_fallthru
      _
    // Predicated region
    $region34: #{tpu_custom_call.1} parent=1 // pred_check
      _
    $region35: #{tpu_custom_call.1} parent=1 // pred_check_branch
      %60 = sbr.rel (0) target = $region37
    $region36: #{tpu_custom_call.1} parent=1 // pred_region
      %61 = dma.done [#allocation6], 128
    $region37: #{tpu_custom_call.1} parent=1 // pred_fallthru
      _
    // Predicated region
    $region38: #{tpu_custom_call.1} parent=1 // pred_check
      _
    $region39: #{tpu_custom_call.1} parent=1 // pred_check_branch
      %63 = sbr.rel (0) target = $region41
    $region40: #{tpu_custom_call.1} parent=1 // pred_region
      %64 = dma.done [#allocation6], 64
    $region41: #{tpu_custom_call.1} parent=1 // pred_fallthru
      _
    %v66 = vld [vmem:[%s6] sm:$0x1]
    %v67 = vld [vmem:[%s6 + $0x1] sm:$0x1]
    %v68 = vld [vmem:[%s6 + $0x2] sm:$0x1]
    %v69 = vld [vmem:[#allocation2] sm:$0xff]
    %v70 = vpack.c.bf16 %v69, %v69
    %v71 = vld [vmem:[#allocation5] sm:$0xff]
    %v72 = vpack.c.bf16 %v71, %v71
    %v73 = vld [vmem:[%s2] sm:$0xf]
    %v74 = vld [vmem:[%s2 + $0x4] sm:$0xf]
    %v75 = vld [vmem:[%s2 + $0x8] sm:$0xf]
    %v76 = vld [vmem:[%s2 + $0xc] sm:$0xf]
    %v78 = vlaneseq
    %v79 = vshrl.u32 %v78, 7
    %v80 = vsub.s32 0, %v79
    %v81 = vrot.slane %v66, %v80
    %v87 = vunpack.c.l.b16 %v73
    %v88 = vunpack.c.l.b16 %v74
    %v89 = vunpack.c.l.b16 %v75
    %v90 = vunpack.c.l.b16 %v76
    %v91 = vpack.c.b16 %v88, %v87
    %v92 = vpack.c.b16 %v90, %v89
    %vm95 = vcmask 261120
    %v97 = vsel %vm95, %v70, 0
    %99 = vmatprep.subr.bf16.mxu0 0
    %100 = vmatpush1.bf16.msra.mxu0 %v91
    %101 = vmatprep.subr.bf16.mxu0 0
    %102 = vmatpush1.bf16.msra.mxu0 %v92
    %103 = vmatprep.subr.bf16.mxu0 0
    %104 = vmatpush1.bf16.msra.mxu0 0
    %105 = vmatprep.subr.bf16.mxu0 0
    %106 = vmatpush1.bf16.msra.mxu0 0
    %107 = vmatprep.subr.bf16.mxu0 0
    %108 = vmatpush1.bf16.msra.mxu0 0
    %109 = vmatprep.subr.bf16.mxu0 0
    %110 = vmatpush1.bf16.msra.mxu0 0
    %111 = vmatprep.subr.bf16.mxu0 0
    %112 = vmatpush1.bf16.msra.mxu0 0
    %113 = vmatprep.subr.bf16.mxu0 0
    %114 = vmatpush1.bf16.msra.mxu0 0
    %115 = vmatprep.subr.bf16.mxu0 0
    %116 = vmatpush1.bf16.msra.mxu0 0
    %117 = vmatprep.subr.bf16.mxu0 0
    %118 = vmatpush1.bf16.msra.mxu0 0
    %119 = vmatprep.subr.bf16.mxu0 0
    %120 = vmatpush1.bf16.msra.mxu0 0
    %121 = vmatprep.subr.bf16.mxu0 0
    %122 = vmatpush1.bf16.msra.mxu0 0
    %123 = vmatprep.subr.bf16.mxu0 0
    %124 = vmatpush1.bf16.msra.mxu0 0
    %125 = vmatprep.subr.bf16.mxu0 0
    %126 = vmatpush1.bf16.msra.mxu0 0
    %127 = vmatprep.subr.bf16.mxu0 0
    %128 = vmatpush1.bf16.msra.mxu0 0
    %129 = vmatprep.subr.bf16.mxu0 0
    %130 = vmatpush1.bf16.msra.mxu0 0
    %131 = vmatprep.mubr.bf16.mxu0 0
    %132 = vmatmul.mubr.bf16.gmra.mrb[0].mxu0 %v97
    %v133 = vpop.f32.mrb[0].mxu0
    %v134 = vadd.f32 %v81, %v133
    %v135 = vpop.f32.mrb[0].mxu0
    %v136 = vpop.f32.mrb[0].mxu0
    %v137 = vpop.f32.mrb[0].mxu0
    %138 = vdwg.mxu0
    %v139 = vmax.f32 %v134, 0.0
    %v140 = vpack.c.bf16 %v139, %v139
    %v141 = vld [vmem:[%s3] sm:$0xf]
    %v142 = vld [vmem:[%s3 + $0x4] sm:$0xf]
    %v143 = vld [vmem:[%s3 + $0x8] sm:$0xf]
    %v144 = vld [vmem:[%s3 + $0xc] sm:$0xf]
    %v145 = vld [vmem:[%s3 + $0x10] sm:$0xf]
    %v146 = vld [vmem:[%s3 + $0x14] sm:$0xf]
    %v147 = vld [vmem:[%s3 + $0x18] sm:$0xf]
    %v148 = vld [vmem:[%s3 + $0x1c] sm:$0xf]
    %v149 = vld [vmem:[%s3 + $0x20] sm:$0xf]
    %v150 = vld [vmem:[%s3 + $0x24] sm:$0xf]
    %v151 = vld [vmem:[%s3 + $0x28] sm:$0xf]
    %v152 = vld [vmem:[%s3 + $0x2c] sm:$0xf]
    %v153 = vld [vmem:[%s3 + $0x30] sm:$0xf]
    %v154 = vld [vmem:[%s3 + $0x34] sm:$0xf]
    %v155 = vld [vmem:[%s3 + $0x38] sm:$0xf]
    %v156 = vld [vmem:[%s3 + $0x3c] sm:$0xf]
    %v157 = vld [vmem:[#allocation7] sm:$0xf]
    %vm158 = vcmask 64512
    %v160 = vsel %vm158, %v72, 0
    %vm162 = vcmask 1043456
    %v164 = vsel %vm162, %v157, 0
    %166 = vmatprep.subr.bf16.mxu0 0
    %167 = vmatpush1.bf16.msra.mxu0 %v164
    %168 = vmatprep.subr.bf16.mxu0 0
    %169 = vmatpush1.bf16.msra.mxu0 0
    %170 = vmatprep.subr.bf16.mxu0 0
    %171 = vmatpush1.bf16.msra.mxu0 0
    %172 = vmatprep.subr.bf16.mxu0 0
    %173 = vmatpush1.bf16.msra.mxu0 0
    %174 = vmatprep.subr.bf16.mxu0 0
    %175 = vmatpush1.bf16.msra.mxu0 0
    %176 = vmatprep.subr.bf16.mxu0 0
    %177 = vmatpush1.bf16.msra.mxu0 0
    %178 = vmatprep.subr.bf16.mxu0 0
    %179 = vmatpush1.bf16.msra.mxu0 0
    %180 = vmatprep.subr.bf16.mxu0 0
    %181 = vmatpush1.bf16.msra.mxu0 0
    %182 = vmatprep.subr.bf16.mxu0 0
    %183 = vmatpush1.bf16.msra.mxu0 0
    %184 = vmatprep.subr.bf16.mxu0 0
    %185 = vmatpush1.bf16.msra.mxu0 0
    %186 = vmatprep.subr.bf16.mxu0 0
    %187 = vmatpush1.bf16.msra.mxu0 0
    %188 = vmatprep.subr.bf16.mxu0 0
    %189 = vmatpush1.bf16.msra.mxu0 0
    %190 = vmatprep.subr.bf16.mxu0 0
    %191 = vmatpush1.bf16.msra.mxu0 0
    %192 = vmatprep.subr.bf16.mxu0 0
    %193 = vmatpush1.bf16.msra.mxu0 0
    %194 = vmatprep.subr.bf16.mxu0 0
    %195 = vmatpush1.bf16.msra.mxu0 0
    %196 = vmatprep.subr.bf16.mxu0 0
    %197 = vmatpush1.bf16.msra.mxu0 0
    %198 = vmatprep.mubr.bf16.mxu0 0
    %199 = vmatmul.mubr.bf16.gmra.mrb[0].mxu0 %v160
    %v200 = vpop.f32.mrb[0].mxu0
    %v201 = vadd.f32 0.0, %v200
    %v202 = vpop.f32.mrb[0].mxu0
    %v203 = vpop.f32.mrb[0].mxu0
    %v204 = vpop.f32.mrb[0].mxu0
    %205 = vdwg.mxu0
    %v222 = vunpack.c.l.b16 %v141
    %v223 = vunpack.c.l.b16 %v142
    %v224 = vunpack.c.l.b16 %v143
    %v225 = vunpack.c.l.b16 %v144
    %v226 = vunpack.c.l.b16 %v145
    %v227 = vunpack.c.l.b16 %v146
    %v228 = vunpack.c.l.b16 %v147
    %v229 = vunpack.c.l.b16 %v148
    %v230 = vunpack.c.l.b16 %v149
    %v231 = vunpack.c.l.b16 %v150
    %v232 = vunpack.c.l.b16 %v151
    %v233 = vunpack.c.l.b16 %v152
    %v234 = vunpack.c.l.b16 %v153
    %v235 = vunpack.c.l.b16 %v154
    %v236 = vunpack.c.l.b16 %v155
    %v237 = vunpack.c.l.b16 %v156
    %v238 = vpack.c.b16 %v223, %v222
    %v239 = vpack.c.b16 %v225, %v224
    %v240 = vpack.c.b16 %v227, %v226
    %v241 = vpack.c.b16 %v229, %v228
    %v242 = vpack.c.b16 %v231, %v230
    %v243 = vpack.c.b16 %v233, %v232
    %v244 = vpack.c.b16 %v235, %v234
    %v245 = vpack.c.b16 %v237, %v236
    %254 = vmatprep.subr.bf16.mxu0 0
    %255 = vmatpush1.bf16.msra.mxu0 %v238
    %256 = vmatprep.subr.bf16.mxu0 0
    %257 = vmatpush1.bf16.msra.mxu0 %v239
    %258 = vmatprep.subr.bf16.mxu0 0
    %259 = vmatpush1.bf16.msra.mxu0 %v240
    %260 = vmatprep.subr.bf16.mxu0 0
    %261 = vmatpush1.bf16.msra.mxu0 %v241
    %262 = vmatprep.subr.bf16.mxu0 0
    %263 = vmatpush1.bf16.msra.mxu0 %v242
    %264 = vmatprep.subr.bf16.mxu0 0
    %265 = vmatpush1.bf16.msra.mxu0 %v243
    %266 = vmatprep.subr.bf16.mxu0 0
    %267 = vmatpush1.bf16.msra.mxu0 %v244
    %268 = vmatprep.subr.bf16.mxu0 0
    %269 = vmatpush1.bf16.msra.mxu0 %v245
    %270 = vmatprep.subr.bf16.mxu0 0
    %271 = vmatpush1.bf16.msra.mxu0 0
    %272 = vmatprep.subr.bf16.mxu0 0
    %273 = vmatpush1.bf16.msra.mxu0 0
    %274 = vmatprep.subr.bf16.mxu0 0
    %275 = vmatpush1.bf16.msra.mxu0 0
    %276 = vmatprep.subr.bf16.mxu0 0
    %277 = vmatpush1.bf16.msra.mxu0 0
    %278 = vmatprep.subr.bf16.mxu0 0
    %279 = vmatpush1.bf16.msra.mxu0 0
    %280 = vmatprep.subr.bf16.mxu0 0
    %281 = vmatpush1.bf16.msra.mxu0 0
    %282 = vmatprep.subr.bf16.mxu0 0
    %283 = vmatpush1.bf16.msra.mxu0 0
    %284 = vmatprep.subr.bf16.mxu0 0
    %285 = vmatpush1.bf16.msra.mxu0 0
    %286 = vmatprep.mubr.bf16.mxu0 0
    %287 = vmatmul.mubr.bf16.gmra.mrb[0].mxu0 %v140
    %v288 = vpop.f32.mrb[0].mxu0
    %v289 = vadd.f32 %v201, %v288
    %v290 = vpop.f32.mrb[0].mxu0
    %v291 = vpop.f32.mrb[0].mxu0
    %v292 = vpop.f32.mrb[0].mxu0
    %293 = vdwg.mxu0
    %v295 = vlaneseq
    %v296 = vshrl.u32 %v295, 7
    %v297 = vsub.s32 0, %v296
    %v298 = vrot.slane %v67, %v297
    %v300 = vadd.f32 %v289, %v298
    %v301 = vmax.f32 %v300, 0.0
    %v302 = vpack.c.bf16 %v301, %v301
    %v303 = vld [vmem:[%s5] sm:$0xf]
    %v304 = vld [vmem:[%s5 + $0x4] sm:$0xf]
    %v305 = vld [vmem:[%s5 + $0x8] sm:$0xf]
    %v306 = vld [vmem:[%s5 + $0xc] sm:$0xf]
    %v307 = vld [vmem:[%s5 + $0x10] sm:$0xf]
    %v308 = vld [vmem:[%s5 + $0x14] sm:$0xf]
    %v309 = vld [vmem:[%s5 + $0x18] sm:$0xf]
    %v310 = vld [vmem:[%s5 + $0x1c] sm:$0xf]
    %v311 = vld [vmem:[%s5 + $0x20] sm:$0xf]
    %v312 = vld [vmem:[%s5 + $0x24] sm:$0xf]
    %v313 = vld [vmem:[%s5 + $0x28] sm:$0xf]
    %v314 = vld [vmem:[%s5 + $0x2c] sm:$0xf]
    %v315 = vld [vmem:[%s5 + $0x30] sm:$0xf]
    %v316 = vld [vmem:[%s5 + $0x34] sm:$0xf]
    %v317 = vld [vmem:[%s5 + $0x38] sm:$0xf]
    %v318 = vld [vmem:[%s5 + $0x3c] sm:$0xf]
    %v320 = vlaneseq
    %v321 = vshrl.u32 %v320, 7
    %v322 = vsub.s32 0, %v321
    %v323 = vrot.slane %v68, %v322
    %v341 = vunpack.c.l.b16 %v303
    %v342 = vunpack.c.l.b16 %v304
    %v343 = vunpack.c.l.b16 %v305
    %v344 = vunpack.c.l.b16 %v306
    %v345 = vunpack.c.l.b16 %v307
    %v346 = vunpack.c.l.b16 %v308
    %v347 = vunpack.c.l.b16 %v309
    %v348 = vunpack.c.l.b16 %v310
    %v349 = vunpack.c.l.b16 %v311
    %v350 = vunpack.c.l.b16 %v312
    %v351 = vunpack.c.l.b16 %v313
    %v352 = vunpack.c.l.b16 %v314
    %v353 = vunpack.c.l.b16 %v315
    %v354 = vunpack.c.l.b16 %v316
    %v355 = vunpack.c.l.b16 %v317
    %v356 = vunpack.c.l.b16 %v318
    %v357 = vpack.c.b16 %v342, %v341
    %v358 = vpack.c.b16 %v344, %v343
    %v359 = vpack.c.b16 %v346, %v345
    %v360 = vpack.c.b16 %v348, %v347
    %v361 = vpack.c.b16 %v350, %v349
    %v362 = vpack.c.b16 %v352, %v351
    %v363 = vpack.c.b16 %v354, %v353
    %v364 = vpack.c.b16 %v356, %v355
    %373 = vmatprep.subr.bf16.mxu0 0
    %374 = vmatpush1.bf16.msra.mxu0 %v357
    %375 = vmatprep.subr.bf16.mxu0 0
    %376 = vmatpush1.bf16.msra.mxu0 %v358
    %377 = vmatprep.subr.bf16.mxu0 0
    %378 = vmatpush1.bf16.msra.mxu0 %v359
    %379 = vmatprep.subr.bf16.mxu0 0
    %380 = vmatpush1.bf16.msra.mxu0 %v360
    %381 = vmatprep.subr.bf16.mxu0 0
    %382 = vmatpush1.bf16.msra.mxu0 %v361
    %383 = vmatprep.subr.bf16.mxu0 0
    %384 = vmatpush1.bf16.msra.mxu0 %v362
    %385 = vmatprep.subr.bf16.mxu0 0
    %386 = vmatpush1.bf16.msra.mxu0 %v363
    %387 = vmatprep.subr.bf16.mxu0 0
    %388 = vmatpush1.bf16.msra.mxu0 %v364
    %389 = vmatprep.subr.bf16.mxu0 0
    %390 = vmatpush1.bf16.msra.mxu0 0
    %391 = vmatprep.subr.bf16.mxu0 0
    %392 = vmatpush1.bf16.msra.mxu0 0
    %393 = vmatprep.subr.bf16.mxu0 0
    %394 = vmatpush1.bf16.msra.mxu0 0
    %395 = vmatprep.subr.bf16.mxu0 0
    %396 = vmatpush1.bf16.msra.mxu0 0
    %397 = vmatprep.subr.bf16.mxu0 0
    %398 = vmatpush1.bf16.msra.mxu0 0
    %399 = vmatprep.subr.bf16.mxu0 0
    %400 = vmatpush1.bf16.msra.mxu0 0
    %401 = vmatprep.subr.bf16.mxu0 0
    %402 = vmatpush1.bf16.msra.mxu0 0
    %403 = vmatprep.subr.bf16.mxu0 0
    %404 = vmatpush1.bf16.msra.mxu0 0
    %405 = vmatprep.mubr.bf16.mxu0 0
    %406 = vmatmul.mubr.bf16.gmra.mrb[0].mxu0 %v302
    %v407 = vpop.f32.mrb[0].mxu0
    %v408 = vadd.f32 %v323, %v407
    %v409 = vpop.f32.mrb[0].mxu0
    %v410 = vpop.f32.mrb[0].mxu0
    %v411 = vpop.f32.mrb[0].mxu0
    %412 = vdwg.mxu0
    %413 = vst.msk [vmem:[#allocation8] sm:$0xff] %vm158, %v408
    %v414 = vmax.f32 %v408, -2.0
    %v415 = vmin.f32 %v414, 2.0
    %417 = vrot.lane.b32.xlu0 %v415, 120
    %v418 = vpop.permute.xlu0 %417
    %420 = vst.msk [vmem:[#allocation9] sm:$0xff] %vm158, %v418
    // Predicated region
    $region42: #{tpu_custom_call.1} parent=1 // pred_check
      _
    $region43: #{tpu_custom_call.1} parent=1 // pred_check_branch
      %422 = sbr.rel (0) target = $region45
    $region44: #{tpu_custom_call.1} parent=1 // pred_region
      %s424 = ssub.s32 128, 128
      %425 = vsyncadd [#allocation4], %s424
      %s427 = sshll.u32 [#allocation8], 4
      %s428 = int_to_ptr.vmem [resolvable:$true] %s427
      %430 = dma.vmem_to_hbm [thread:$0]  %s428, 128, %s7, [#allocation4]
    $region45: #{tpu_custom_call.1} parent=1 // pred_fallthru
      _
    // Predicated region
    $region46: #{tpu_custom_call.1} parent=1 // pred_check
      _
    $region47: #{tpu_custom_call.1} parent=1 // pred_check_branch
      %432 = sbr.rel (0) target = $region49
    $region48: #{tpu_custom_call.1} parent=1 // pred_region
      %s434 = ssub.s32 128, 128
      %435 = vsyncadd [#allocation10], %s434
      %s437 = sshll.u32 [#allocation9], 4
      %s438 = int_to_ptr.vmem [resolvable:$true] %s437
      %440 = dma.vmem_to_hbm [thread:$0]  %s438, 128, %s8, [#allocation10]
    $region49: #{tpu_custom_call.1} parent=1 // pred_fallthru
      _
    // Predicated region
    $region50: #{tpu_custom_call.1} parent=1 // pred_check
      _
    $region51: #{tpu_custom_call.1} parent=1 // pred_check_branch
      %442 = sbr.rel (0) target = $region53
    $region52: #{tpu_custom_call.1} parent=1 // pred_region
      %443 = dma.done [#allocation4], 128
    $region53: #{tpu_custom_call.1} parent=1 // pred_fallthru
      _
    // Predicated region
    $region54: #{tpu_custom_call.1} parent=1 // pred_check
      _
    $region55: #{tpu_custom_call.1} parent=1 // pred_check_branch
      %445 = sbr.rel (0) target = $region57
    $region56: #{tpu_custom_call.1} parent=1 // pred_region
      %446 = dma.done [#allocation10], 128
    $region57: #{tpu_custom_call.1} parent=1 // pred_fallthru
      _
    %447 = vsyncpa [#allocation3], 1
    %448 = vsyncpa [#allocation6], 1
    %449 = vsyncpa [#allocation4], 1
    %450 = vsyncpa [#allocation10], 1

</llo_original>
